<compile_context>
chip_gen: v6e
topology: v6e:2x2x1
jax: 0.10.0
libtpu: 0.0.40
codegen_flags: <defaults>
</compile_context>

<pallas_src>
import math

import jax
import jax.numpy as jnp
from jax import lax
from jax.experimental import pallas as pl
from jax.experimental.pallas import tpu as pltpu


def _mlp_kernel(x_ref, w1_ref, b1_ref, w2_ref, b2_ref, o_ref):
    # Hidden layer: Linear(4 -> 64), f32 accumulation on the MXU.
    h = jnp.dot(x_ref[...], w1_ref[...], preferred_element_type=jnp.float32)
    h = h + b1_ref[...].astype(jnp.float32)          # (TM, 64) + (1, 64)

    # Exact GELU (matches torch nn.GELU() default, erf-based), kept in f32.
    h = 0.5 * h * (1.0 + lax.erf(h * (1.0 / math.sqrt(2.0))))

    # Output layer: Linear(64 -> 128)
    out = jnp.dot(h.astype(w2_ref.dtype), w2_ref[...],
                  preferred_element_type=jnp.float32)
    out = out + b2_ref[...].astype(jnp.float32)       # (TM, 128) + (1, 128)
    o_ref[...] = out.astype(o_ref.dtype)


def _round_up(n, m):
    return ((n + m - 1) // m) * m


def mlp_forward(x, w1, b1, w2, b2, *, tm=512):
    """x: (B, 4); w1: (4, 64); b1: (1, 64); w2: (64, 128); b2: (1, 128)."""
    B, d_in = x.shape
    d_hidden = w1.shape[1]
    d_out = w2.shape[1]
    out_dtype = x.dtype

    # Batch tile: multiple of 8 sublanes (f32), never larger than the (padded) batch.
    tm = max(8, min(tm, _round_up(B, 8)))
    b_pad = _round_up(B, tm)
    if b_pad != B:
        # Padded rows compute garbage (bias->gelu->bias) and are sliced off below.
        x = jnp.pad(x, ((0, b_pad - B), (0, 0)))

    grid = (pl.cdiv(b_pad, tm),)

    itemsize = jnp.dtype(out_dtype).itemsize
    cost = pl.CostEstimate(
        flops=2 * b_pad * (d_in * d_hidden + d_hidden * d_out),
        transcendentals=b_pad * d_hidden,                      # erf per hidden unit
        bytes_accessed=(b_pad * (d_in + d_out) * itemsize
                        + (w1.size + b1.size + w2.size + b2.size)
                        * jnp.dtype(w1.dtype).itemsize),
    )

    out = pl.pallas_call(
        _mlp_kernel,
        out_shape=jax.ShapeDtypeStruct((b_pad, d_out), out_dtype),
        grid=grid,
        in_specs=[
            # Batch-tiled activation: new (TM, 4) slab per grid step.
            pl.BlockSpec((tm, d_in), lambda i: (i, 0)),
            # Weights/biases: full-array blocks, constant index -> VMEM-resident.
            pl.BlockSpec(w1.shape, lambda i: (0, 0)),
            pl.BlockSpec(b1.shape, lambda i: (0, 0)),
            pl.BlockSpec(w2.shape, lambda i: (0, 0)),
            pl.BlockSpec(b2.shape, lambda i: (0, 0)),
        ],
        # Lane-dense output: full 128-wide feature dim per tile.
        out_specs=pl.BlockSpec((tm, d_out), lambda i: (i, 0)),
        compiler_params=pltpu.CompilerParams(
            dimension_semantics=("parallel",)),
        cost_estimate=cost,
    )(x, w1, b1, w2, b2)

    return out[:B] if b_pad != B else out


def init_params(key, layers=(4, 64, 128)):
    """Deterministic init mimicking nn.Linear's kaiming-uniform-style bounds."""
    params = []
    for i in range(len(layers) - 1):
        fan_in, fan_out = layers[i], layers[i + 1]
        key, kw, kb = jax.random.split(key, 3)
        bound = 1.0 / math.sqrt(fan_in)
        # Stored pre-transposed: (fan_in, fan_out) so kernel does y = x @ W + b.
        w = jax.random.uniform(kw, (fan_in, fan_out), jnp.float32, -bound, bound)
        b = jax.random.uniform(kb, (1, fan_out), jnp.float32, -bound, bound)
        params.append((w, b))
    return params


def _reference(x, w1, b1, w2, b2):
    h = x @ w1 + b1
    h = 0.5 * h * (1.0 + lax.erf(h / math.sqrt(2.0)))
    return h @ w2 + b2


if __name__ == "__main__":
    key = jax.random.PRNGKey(0)
    (w1, b1), (w2, b2) = init_params(key, layers=(4, 64, 128))

    # Small-batch case (single grid step, tile == padded batch).
    key, kx = jax.random.split(key)
    x_small = jax.random.normal(kx, (8, 4), jnp.float32)
    out_small = jax.block_until_ready(mlp_forward(x_small, w1, b1, w2, b2))
    ref_small = _reference(x_small, w1, b1, w2, b2)
    assert out_small.shape == (8, 128), out_small.shape
    assert jnp.allclose(out_small, ref_small, atol=1e-5, rtol=1e-5), \
        "small-batch mismatch vs reference"

    # Ragged multi-tile case (B=1000, TM=512 -> padded to 1024, grid=(2,)).
    key, kx2 = jax.random.split(key)
    x_big = jax.random.normal(kx2, (1000, 4), jnp.float32)
    out_big = jax.block_until_ready(mlp_forward(x_big, w1, b1, w2, b2))
    ref_big = _reference(x_big, w1, b1, w2, b2)
    assert out_big.shape == (1000, 128), out_big.shape
    assert jnp.allclose(out_big, ref_big, atol=1e-5, rtol=1e-5), \
        "multi-tile mismatch vs reference"

    print("KERNEL_OK")
</pallas_src>

<mosaic_0001>
module attributes {stable_mosaic.version = 11 : i64} {
  func.func @_mlp_kernel(%arg0: i32, %arg1: memref<8x4xf32, #tpu.memory_space<vmem>>, %arg2: memref<4x64xf32, #tpu.memory_space<vmem>>, %arg3: memref<1x64xf32, #tpu.memory_space<vmem>>, %arg4: memref<64x128xf32, #tpu.memory_space<vmem>>, %arg5: memref<1x128xf32, #tpu.memory_space<vmem>>, %arg6: memref<8x128xf32, #tpu.memory_space<vmem>>) attributes {dimension_semantics = [#tpu.dimension_semantics<parallel>], iteration_bounds = array<i64: 1>, scalar_prefetch = 0 : i64, scratch_operands = 0 : i64, tpu.core_type = #tpu.core_type<tc>, window_params = [{transform_indices = @transform_0, window_bounds = array<i64: 8, 4>}, {pipeline_mode = #tpu.pipeline_mode<synchronous>, transform_indices = @transform_1, window_bounds = array<i64: 4, 64>}, {pipeline_mode = #tpu.pipeline_mode<synchronous>, transform_indices = @transform_2, window_bounds = array<i64: 1, 64>}, {pipeline_mode = #tpu.pipeline_mode<synchronous>, transform_indices = @transform_3, window_bounds = array<i64: 64, 128>}, {pipeline_mode = #tpu.pipeline_mode<synchronous>, transform_indices = @transform_4, window_bounds = array<i64: 1, 128>}, {transform_indices = @transform_5, window_bounds = array<i64: 8, 128>}]} {
    %c0 = arith.constant 0 : index
    %c0_0 = arith.constant 0 : index
    %0 = vector.load %arg1[%c0, %c0_0] : memref<8x4xf32, #tpu.memory_space<vmem>>, vector<8x4xf32>
    %c0_1 = arith.constant 0 : index
    %c0_2 = arith.constant 0 : index
    %1 = vector.load %arg2[%c0_1, %c0_2] : memref<4x64xf32, #tpu.memory_space<vmem>>, vector<4x64xf32>
    %cst = arith.constant dense<0.000000e+00> : vector<8x64xf32>
    %2 = tpu.matmul %0, %1, %cst {dimension_numbers = #tpu.dot_dimension_numbers<[1], [0], [0], [1], [0, 0, 1, 1], [], []>} : vector<8x4xf32>, vector<4x64xf32>, vector<8x64xf32> -> vector<8x64xf32>
    %c0_3 = arith.constant 0 : index
    %c0_4 = arith.constant 0 : index
    %3 = vector.load %arg3[%c0_3, %c0_4] : memref<1x64xf32, #tpu.memory_space<vmem>>, vector<1x64xf32>
    %4 = vector.broadcast %3 : vector<1x64xf32> to vector<8x64xf32>
    %5 = arith.addf %2, %4 : vector<8x64xf32>
    %cst_5 = arith.constant 5.000000e-01 : f32
    %6 = vector.broadcast %cst_5 : f32 to vector<8x64xf32>
    %7 = arith.mulf %6, %5 : vector<8x64xf32>
    %cst_6 = arith.constant 0.707106769 : f32
    %8 = vector.broadcast %cst_6 : f32 to vector<8x64xf32>
    %9 = arith.mulf %5, %8 : vector<8x64xf32>
    %10 = math.erf %9 : vector<8x64xf32>
    %cst_7 = arith.constant 1.000000e+00 : f32
    %11 = vector.broadcast %cst_7 : f32 to vector<8x64xf32>
    %12 = arith.addf %11, %10 : vector<8x64xf32>
    %13 = arith.mulf %7, %12 : vector<8x64xf32>
    %c0_8 = arith.constant 0 : index
    %c0_9 = arith.constant 0 : index
    %14 = vector.load %arg4[%c0_8, %c0_9] : memref<64x128xf32, #tpu.memory_space<vmem>>, vector<64x128xf32>
    %cst_10 = arith.constant dense<0.000000e+00> : vector<8x128xf32>
    %15 = tpu.matmul %13, %14, %cst_10 {dimension_numbers = #tpu.dot_dimension_numbers<[1], [0], [0], [1], [0, 0, 1, 1], [], []>} : vector<8x64xf32>, vector<64x128xf32>, vector<8x128xf32> -> vector<8x128xf32>
    %c0_11 = arith.constant 0 : index
    %c0_12 = arith.constant 0 : index
    %16 = vector.load %arg5[%c0_11, %c0_12] : memref<1x128xf32, #tpu.memory_space<vmem>>, vector<1x128xf32>
    %17 = vector.broadcast %16 : vector<1x128xf32> to vector<8x128xf32>
    %18 = arith.addf %15, %17 : vector<8x128xf32>
    %c0_13 = arith.constant 0 : index
    %c0_14 = arith.constant 0 : index
    %19 = vector.load %arg6[%c0_13, %c0_14] : memref<8x128xf32, #tpu.memory_space<vmem>>, vector<8x128xf32>
    tpu.vector_store %arg6[%c0_13, %c0_14], %18 {strides = array<i32>} : memref<8x128xf32, #tpu.memory_space<vmem>>, vector<8x128xf32>,
    return
  }
  func.func @transform_0(%arg0: i32) -> (i32, i32) {
    %c0_i32 = arith.constant 0 : i32
    %c0_i32_0 = arith.constant 0 : i32
    return %arg0, %c0_i32 : i32, i32
  }
  func.func @transform_1(%arg0: i32) -> (i32, i32) {
    %c0_i32 = arith.constant 0 : i32
    %c0_i32_0 = arith.constant 0 : i32
    %c0_i32_1 = arith.constant 0 : i32
    return %c0_i32, %c0_i32_0 : i32, i32
  }
  func.func @transform_2(%arg0: i32) -> (i32, i32) {
    %c0_i32 = arith.constant 0 : i32
    %c0_i32_0 = arith.constant 0 : i32
    %c0_i32_1 = arith.constant 0 : i32
    return %c0_i32, %c0_i32_0 : i32, i32
  }
  func.func @transform_3(%arg0: i32) -> (i32, i32) {
    %c0_i32 = arith.constant 0 : i32
    %c0_i32_0 = arith.constant 0 : i32
    %c0_i32_1 = arith.constant 0 : i32
    return %c0_i32, %c0_i32_0 : i32, i32
  }
  func.func @transform_4(%arg0: i32) -> (i32, i32) {
    %c0_i32 = arith.constant 0 : i32
    %c0_i32_0 = arith.constant 0 : i32
    %c0_i32_1 = arith.constant 0 : i32
    return %c0_i32, %c0_i32_0 : i32, i32
  }
  func.func @transform_5(%arg0: i32) -> (i32, i32) {
    %c0_i32 = arith.constant 0 : i32
    %c0_i32_0 = arith.constant 0 : i32
    return %arg0, %c0_i32 : i32, i32
  }
}

</mosaic_0001>

<llo_original>
// kernel: tpu_custom_call.1
$region0: #{tpu_custom_call.1}
  #allocation0 [shape = 'u32[]', space=smem, size = 0x4, offset = 0x4, fixed_abs, tag = 'smem constant byte address 0x4 - core index']
  #allocation1 [shape = 'u32[144,128]{1,0:T(1,128)}', space=vmem, size = 0x12000, scoped, tag = 'internal scratch']
  %s0 = inlined_call_operand.vmem [shape: f32[8,4], index: 0, kind: input, shape index: {}]
  %s1 = inlined_call_operand.vmem [shape: f32[4,64], index: 1, kind: input, shape index: {}]
  %s2 = inlined_call_operand.vmem [shape: f32[1,64], index: 2, kind: input, shape index: {}]
  %s3 = inlined_call_operand.hbm [shape: f32[64,128], index: 3, kind: input, shape index: {}]
  %s4 = inlined_call_operand.vmem [shape: f32[1,128], index: 4, kind: input, shape index: {}]
  %s5 = inlined_call_operand.hbm [shape: f32[8,128], index: 5, kind: output, shape index: {}]
  %s6 = sld [smem:[#allocation0]]
  $region34: #{tpu_custom_call.1} parent=0
    _
  %s8 = ssub.s32 1, %s6
  %s9 = scalar_select 0, %s8, %s6
  $region1: #{tpu_custom_call.1} parent=0
    #allocation2 [shape = 'u8[32768]{0}', space=vmem, size = 0x8000, scoped, tag = 'input window, operand 3, single buffered']
    #allocation3 [shape = 's32[1]{0}', space=sflag, size = 0x4, scoped, tag = 'scoped memory for tpu_custom_call.1']
    #allocation4 [shape = 's32[1]{0}', space=sflag, size = 0x4, scoped, tag = 'scoped memory for tpu_custom_call.1']
    #allocation5 [shape = 'u8[4096]{0}', space=vmem, size = 0x1000, scoped, tag = 'output window, operand 0, single buffered']
    %10 = vsyncpa [#allocation3], 0
    %11 = vsyncpa [#allocation4], 0
    // Predicated region
    $region2: #{tpu_custom_call.1} parent=1 // pred_check
      _
    $region3: #{tpu_custom_call.1} parent=1 // pred_check_branch
      %13 = sbr.rel (0) target = $region5
    $region4: #{tpu_custom_call.1} parent=1 // pred_region
      _
    $region5: #{tpu_custom_call.1} parent=1 // pred_fallthru
      _
    // Predicated region
    $region6: #{tpu_custom_call.1} parent=1 // pred_check
      _
    $region7: #{tpu_custom_call.1} parent=1 // pred_check_branch
      %15 = sbr.rel (0) target = $region9
    $region8: #{tpu_custom_call.1} parent=1 // pred_region
      _
    $region9: #{tpu_custom_call.1} parent=1 // pred_fallthru
      _
    // Predicated region
    $region10: #{tpu_custom_call.1} parent=1 // pred_check
      _
    $region11: #{tpu_custom_call.1} parent=1 // pred_check_branch
      %17 = sbr.rel (0) target = $region13
    $region12: #{tpu_custom_call.1} parent=1 // pred_region
      _
    $region13: #{tpu_custom_call.1} parent=1 // pred_fallthru
      _
    // Predicated region
    $region14: #{tpu_custom_call.1} parent=1 // pred_check
      _
    $region15: #{tpu_custom_call.1} parent=1 // pred_check_branch
      %19 = sbr.rel (0) target = $region17
    $region16: #{tpu_custom_call.1} parent=1 // pred_region
      %s21 = ssub.s32 1024, 1024
      %22 = vsyncadd [#allocation3], %s21
      %s23 = sshll.u32 [#allocation2], 4
      %s24 = int_to_ptr.vmem [resolvable:$true] %s23
      %29 = dma.hbm_to_vmem [thread:$0]  %s3, 1024, %s24, [#allocation3], 128, 128, 8
    $region17: #{tpu_custom_call.1} parent=1 // pred_fallthru
      _
    // Predicated region
    $region18: #{tpu_custom_call.1} parent=1 // pred_check
      _
    $region19: #{tpu_custom_call.1} parent=1 // pred_check_branch
      %31 = sbr.rel (0) target = $region21
    $region20: #{tpu_custom_call.1} parent=1 // pred_region
      _
    $region21: #{tpu_custom_call.1} parent=1 // pred_fallthru
      _
    // Predicated region
    $region22: #{tpu_custom_call.1} parent=1 // pred_check
      _
    $region23: #{tpu_custom_call.1} parent=1 // pred_check_branch
      %33 = sbr.rel (0) target = $region25
    $region24: #{tpu_custom_call.1} parent=1 // pred_region
      %34 = dma.done [#allocation3], 1024
    $region25: #{tpu_custom_call.1} parent=1 // pred_fallthru
      _
    %v35 = vld [vmem:[%s0] sm:$0xff]
    %v36 = vld [vmem:[%s1] sm:$0xf]
    %v37 = vld [vmem:[%s2] sm:$0x1]
    %v39 = vlaneseq
    %v40 = vshrl.u32 %v39, 7
    %v41 = vsub.s32 0, %v40
    %v42 = vrot.slane %v37, %v41
    %vm44 = vcmask 31744
    %v46 = vsel %vm44, %v35, 0
    %vm48 = vcmask 1043456
    %v50 = vsel %vm48, %v36, 0
    %52 = vmatprep.subr.mxu0 0.0
    %53 = vmatpush1.msra.mxu0 0.0
    %54 = vmatprep.subr.mxu0 0.0
    %55 = vmatpush1.msra.mxu0 0.0
    %56 = vmatprep.subr.mxu0 0.0
    %57 = vmatpush1.msra.mxu0 0.0
    %58 = vmatprep.subr.mxu0 0.0
    %59 = vmatpush1.msra.mxu0 0.0
    %60 = vmatprep.subr.mxu0 0.0
    %61 = vmatpush1.msra.mxu0 0.0
    %62 = vmatprep.subr.mxu0 0.0
    %63 = vmatpush1.msra.mxu0 0.0
    %64 = vmatprep.subr.mxu0 0.0
    %65 = vmatpush1.msra.mxu0 0.0
    %66 = vmatprep.subr.mxu0 0.0
    %67 = vmatpush1.msra.mxu0 0.0
    %68 = vmatprep.subr.mxu0 0.0
    %69 = vmatpush1.msra.mxu0 0.0
    %70 = vmatprep.subr.mxu0 0.0
    %71 = vmatpush1.msra.mxu0 0.0
    %72 = vmatprep.subr.mxu0 0.0
    %73 = vmatpush1.msra.mxu0 0.0
    %74 = vmatprep.subr.mxu0 0.0
    %75 = vmatpush1.msra.mxu0 0.0
    %76 = vmatprep.subr.mxu0 0.0
    %77 = vmatpush1.msra.mxu0 0.0
    %78 = vmatprep.subr.mxu0 0.0
    %79 = vmatpush1.msra.mxu0 0.0
    %80 = vmatprep.subr.mxu0 0.0
    %81 = vmatpush1.msra.mxu0 0.0
    %82 = vmatprep.subr.mxu0 0.0
    %83 = vmatpush1.msra.mxu0 %v50
    %84 = vmatprep.subr.mxu0 0.0
    %85 = vmatpush2.msra.mxu0 0.0
    %86 = vmatprep.subr.mxu0 0.0
    %87 = vmatpush2.msra.mxu0 0.0
    %88 = vmatprep.subr.mxu0 0.0
    %89 = vmatpush2.msra.mxu0 0.0
    %90 = vmatprep.subr.mxu0 0.0
    %91 = vmatpush2.msra.mxu0 0.0
    %92 = vmatprep.subr.mxu0 0.0
    %93 = vmatpush2.msra.mxu0 0.0
    %94 = vmatprep.subr.mxu0 0.0
    %95 = vmatpush2.msra.mxu0 0.0
    %96 = vmatprep.subr.mxu0 0.0
    %97 = vmatpush2.msra.mxu0 0.0
    %98 = vmatprep.subr.mxu0 0.0
    %99 = vmatpush2.msra.mxu0 0.0
    %100 = vmatprep.subr.mxu0 0.0
    %101 = vmatpush2.msra.mxu0 0.0
    %102 = vmatprep.subr.mxu0 0.0
    %103 = vmatpush2.msra.mxu0 0.0
    %104 = vmatprep.subr.mxu0 0.0
    %105 = vmatpush2.msra.mxu0 0.0
    %106 = vmatprep.subr.mxu0 0.0
    %107 = vmatpush2.msra.mxu0 0.0
    %108 = vmatprep.subr.mxu0 0.0
    %109 = vmatpush2.msra.mxu0 0.0
    %110 = vmatprep.subr.mxu0 0.0
    %111 = vmatpush2.msra.mxu0 0.0
    %112 = vmatprep.subr.mxu0 0.0
    %113 = vmatpush2.msra.mxu0 0.0
    %114 = vmatprep.subr.mxu0 0.0
    %115 = vmatpush2.msra.mxu0 0.0
    %116 = vmatprep.mubr.f32.mxu0 0.0
    %117 = vmatmul.mubr.f32.gmra.mxu0 %v46
    %v118 = vpop.f32.mrf.mxu0
    %v119 = vadd.f32 %v42, %v118
    %v120 = vpop.f32.mrf.mxu0
    %121 = vdwg.mxu0
    %v122 = vmul.f32 %v119, 0.5
    %v123 = vmul.f32 %v119, 0.70710677
    %v124 = verf.f32.pop %v123
    %v125 = vadd.f32 %v124, 1.0
    %v126 = vmul.f32 %v122, %v125
    %v127 = vld [vmem:[#allocation2] sm:$0xff]
    %v128 = vld [vmem:[#allocation2 + $0x8] sm:$0xff]
    %v129 = vld [vmem:[#allocation2 + $0x10] sm:$0xff]
    %v130 = vld [vmem:[#allocation2 + $0x18] sm:$0xff]
    %v131 = vld [vmem:[#allocation2 + $0x20] sm:$0xff]
    %v132 = vld [vmem:[#allocation2 + $0x28] sm:$0xff]
    %v133 = vld [vmem:[#allocation2 + $0x30] sm:$0xff]
    %v134 = vld [vmem:[#allocation2 + $0x38] sm:$0xff]
    %v135 = vld [vmem:[%s4] sm:$0x1]
    %v137 = vlaneseq
    %v138 = vshrl.u32 %v137, 7
    %v139 = vsub.s32 0, %v138
    %v140 = vrot.slane %v135, %v139
    %vm142 = vcmask 523264
    %v144 = vsel %vm142, %v126, 0
    %146 = vmatprep.subr.mxu0 0.0
    %147 = vmatpush1.msra.mxu0 0.0
    %148 = vmatprep.subr.mxu0 0.0
    %149 = vmatpush1.msra.mxu0 0.0
    %150 = vmatprep.subr.mxu0 0.0
    %151 = vmatpush1.msra.mxu0 0.0
    %152 = vmatprep.subr.mxu0 0.0
    %153 = vmatpush1.msra.mxu0 0.0
    %154 = vmatprep.subr.mxu0 0.0
    %155 = vmatpush1.msra.mxu0 0.0
    %156 = vmatprep.subr.mxu0 0.0
    %157 = vmatpush1.msra.mxu0 0.0
    %158 = vmatprep.subr.mxu0 0.0
    %159 = vmatpush1.msra.mxu0 0.0
    %160 = vmatprep.subr.mxu0 0.0
    %161 = vmatpush1.msra.mxu0 0.0
    %162 = vmatprep.subr.mxu0 0.0
    %163 = vmatpush1.msra.mxu0 %v134
    %164 = vmatprep.subr.mxu0 0.0
    %165 = vmatpush1.msra.mxu0 %v133
    %166 = vmatprep.subr.mxu0 0.0
    %167 = vmatpush1.msra.mxu0 %v132
    %168 = vmatprep.subr.mxu0 0.0
    %169 = vmatpush1.msra.mxu0 %v131
    %170 = vmatprep.subr.mxu0 0.0
    %171 = vmatpush1.msra.mxu0 %v130
    %172 = vmatprep.subr.mxu0 0.0
    %173 = vmatpush1.msra.mxu0 %v129
    %174 = vmatprep.subr.mxu0 0.0
    %175 = vmatpush1.msra.mxu0 %v128
    %176 = vmatprep.subr.mxu0 0.0
    %177 = vmatpush1.msra.mxu0 %v127
    %178 = vmatprep.subr.mxu0 0.0
    %179 = vmatpush2.msra.mxu0 0.0
    %180 = vmatprep.subr.mxu0 0.0
    %181 = vmatpush2.msra.mxu0 0.0
    %182 = vmatprep.subr.mxu0 0.0
    %183 = vmatpush2.msra.mxu0 0.0
    %184 = vmatprep.subr.mxu0 0.0
    %185 = vmatpush2.msra.mxu0 0.0
    %186 = vmatprep.subr.mxu0 0.0
    %187 = vmatpush2.msra.mxu0 0.0
    %188 = vmatprep.subr.mxu0 0.0
    %189 = vmatpush2.msra.mxu0 0.0
    %190 = vmatprep.subr.mxu0 0.0
    %191 = vmatpush2.msra.mxu0 0.0
    %192 = vmatprep.subr.mxu0 0.0
    %193 = vmatpush2.msra.mxu0 0.0
    %194 = vmatprep.subr.mxu0 0.0
    %195 = vmatpush2.msra.mxu0 0.0
    %196 = vmatprep.subr.mxu0 0.0
    %197 = vmatpush2.msra.mxu0 0.0
    %198 = vmatprep.subr.mxu0 0.0
    %199 = vmatpush2.msra.mxu0 0.0
    %200 = vmatprep.subr.mxu0 0.0
    %201 = vmatpush2.msra.mxu0 0.0
    %202 = vmatprep.subr.mxu0 0.0
    %203 = vmatpush2.msra.mxu0 0.0
    %204 = vmatprep.subr.mxu0 0.0
    %205 = vmatpush2.msra.mxu0 0.0
    %206 = vmatprep.subr.mxu0 0.0
    %207 = vmatpush2.msra.mxu0 0.0
    %208 = vmatprep.subr.mxu0 0.0
    %209 = vmatpush2.msra.mxu0 0.0
    %210 = vmatprep.mubr.f32.mxu0 0.0
    %211 = vmatmul.mubr.f32.gmra.mxu0 %v144
    %v212 = vpop.f32.mrf.mxu0
    %v213 = vadd.f32 %v140, %v212
    %v214 = vpop.f32.mrf.mxu0
    %215 = vdwg.mxu0
    %216 = vst [vmem:[#allocation5] sm:$0xff] %v213
    // Predicated region
    $region26: #{tpu_custom_call.1} parent=1 // pred_check
      _
    $region27: #{tpu_custom_call.1} parent=1 // pred_check_branch
      %218 = sbr.rel (0) target = $region29
    $region28: #{tpu_custom_call.1} parent=1 // pred_region
      %s220 = ssub.s32 128, 128
      %221 = vsyncadd [#allocation4], %s220
      %s223 = sshll.u32 [#allocation5], 4
      %s224 = int_to_ptr.vmem [resolvable:$true] %s223
      %226 = dma.vmem_to_hbm [thread:$0]  %s224, 128, %s5, [#allocation4]
    $region29: #{tpu_custom_call.1} parent=1 // pred_fallthru
      _
    // Predicated region
    $region30: #{tpu_custom_call.1} parent=1 // pred_check
      _
    $region31: #{tpu_custom_call.1} parent=1 // pred_check_branch
      %228 = sbr.rel (0) target = $region33
    $region32: #{tpu_custom_call.1} parent=1 // pred_region
      %229 = dma.done [#allocation4], 128
    $region33: #{tpu_custom_call.1} parent=1 // pred_fallthru
      _
    %230 = vsyncpa [#allocation3], 1
    %231 = vsyncpa [#allocation4], 1

</llo_original>
